<compile_context>
chip_gen: v7x
topology: tpu7x:2x2x1
jax: 0.10.0
libtpu: 0.0.40
codegen_flags: <defaults>
</compile_context>

<pallas_src>
import functools

import jax
import jax.numpy as jnp
from jax.experimental import pallas as pl
from jax.experimental.pallas import tpu as pltpu


def _round_up(x: int, m: int) -> int:
    return ((x + m - 1) // m) * m


# Keep headroom under the 32 MiB scoped VMEM limit (also safe on v7x's 64 MiB).
_VMEM_BUDGET = 24 * 1024 * 1024


def _vmem_block_bytes(b, cin, cout, tile, in_bytes, out_bytes):
    # double-buffered x/out blocks + resident weight + resident bias
    return (2 * b * tile * (cin * in_bytes + cout * out_bytes)
            + cout * cin * in_bytes + cout * 4)


def _adjust_kernel(w_ref, b_ref, x_ref, o_ref):
    # w_ref: (Cout, Cin)   BN-scale-folded 1x1 conv weight (resident, bf16/f32)
    # b_ref: (Cout, 1)     folded BN bias (resident, f32 -> epilogue stays f32)
    # x_ref: (B, Cin, T)   activation block, pixels on the lane dim
    # o_ref: (B, Cout, T)  output block, pixels on the lane dim (lane-dense)
    w = w_ref[...]
    bias = b_ref[...]
    n_imgs = x_ref.shape[0]
    for i in range(n_imgs):                      # static unroll over images
        y = jnp.dot(w, x_ref[i], preferred_element_type=jnp.float32)
        o_ref[i] = (y + bias).astype(o_ref.dtype)


@functools.partial(jax.jit,
                   static_argnames=("eps", "tile_hw", "compute_dtype"))
def adjust_layer(x_nchw, weight, gamma, beta, running_mean, running_var,
                 eps: float = 1e-5, tile_hw: int = 512,
                 compute_dtype=jnp.bfloat16):
    """Forward of AdjustLayer: 1x1 conv (no bias) + BatchNorm2d (eval mode).

    x_nchw: (N, Cin, H, W) float32
    weight: (Cout, Cin, 1, 1) float32   (PyTorch Conv2d weight layout)
    """
    N, Cin, H, W = x_nchw.shape
    Cout = weight.shape[0]
    out_dtype = jnp.float32

    # ---- fold BN into the conv (per-output-channel affine), in f32 ----------
    scale = gamma.astype(jnp.float32) / jnp.sqrt(
        running_var.astype(jnp.float32) + eps)                       # (Cout,)
    bias = beta.astype(jnp.float32) - running_mean.astype(jnp.float32) * scale
    w2d = (weight.reshape(Cout, Cin).astype(jnp.float32)
           * scale[:, None]).astype(compute_dtype)                   # (Cout,Cin)
    b2d = bias.reshape(Cout, 1)                                       # f32

    # ---- NCHW-native: pixels flattened onto the lane dim (pure reshape) -----
    HW = H * W
    x3d = x_nchw.reshape(N, Cin, HW).astype(compute_dtype)
    in_bytes = jnp.dtype(compute_dtype).itemsize
    out_bytes = jnp.dtype(out_dtype).itemsize

    # ---- pixel tiling: no padding in the common cases ------------------------
    tile_hw = max(128, (tile_hw // 128) * 128)     # clamp to a multiple of 128
    HWp = HW
    if HW % 128 == 0 and HW > tile_hw:
        # Largest multiple of 128 that divides HW, <= tile_hw, within VMEM budget.
        tile = 128
        d = HW // 128
        for k in range(1, d + 1):
            cand = 128 * k
            if (d % k == 0 and cand <= tile_hw and
                    _vmem_block_bytes(1, Cin, Cout, cand, in_bytes, out_bytes)
                    <= _VMEM_BUDGET):
                tile = cand
    elif _vmem_block_bytes(1, Cin, Cout, HW, in_bytes, out_bytes) <= _VMEM_BUDGET:
        # Ragged or small pixel axis: block last dim == full extent (legal),
        # so no jnp.pad and no output slice -> no extra HBM passes.
        tile = HW
    else:
        # Rare fallback: huge ragged HW that cannot be one block.  Pad only to
        # a multiple of 128 (not to a multiple of tile) and tile.
        HWp = _round_up(HW, 128)
        tile = 128
        d = HWp // 128
        for k in range(1, d + 1):
            cand = 128 * k
            if (d % k == 0 and cand <= tile_hw and
                    _vmem_block_bytes(1, Cin, Cout, cand, in_bytes, out_bytes)
                    <= _VMEM_BUDGET):
                tile = cand
        x3d = jnp.pad(x3d, ((0, 0), (0, 0), (0, HWp - HW)))
    n_hw = HWp // tile

    # ---- pack several small images per grid step (amortize per-step cost) ---
    imgs_per_step = 1
    if n_hw == 1 and HW <= 256 and N > 1:
        max_b = max(1, 512 // HW)                  # target ~512 lanes per step
        for cand in range(min(N, max_b), 0, -1):
            if N % cand != 0:
                continue
            steps = (N // cand) * n_hw
            if steps < 2 and N * n_hw >= 2:        # keep >=2 steps (v7x 2 TCs)
                continue
            if (_vmem_block_bytes(cand, Cin, Cout, tile, in_bytes, out_bytes)
                    > _VMEM_BUDGET):
                continue
            imgs_per_step = cand
            break
    B = imgs_per_step

    grid = (N // B, n_hw)
    out3d = pl.pallas_call(
        _adjust_kernel,
        out_shape=jax.ShapeDtypeStruct((N, Cout, HWp), out_dtype),
        grid_spec=pltpu.PrefetchScalarGridSpec(
            num_scalar_prefetch=0,
            grid=grid,
            in_specs=[
                pl.BlockSpec((Cout, Cin), lambda n, j: (0, 0)),   # weight (resident)
                pl.BlockSpec((Cout, 1), lambda n, j: (0, 0)),     # bias   (resident)
                pl.BlockSpec((B, Cin, tile), lambda n, j: (n, 0, j)),
            ],
            out_specs=pl.BlockSpec((B, Cout, tile), lambda n, j: (n, 0, j)),
        ),
        compiler_params=pltpu.CompilerParams(
            dimension_semantics=("parallel", "parallel"),
            vmem_limit_bytes=32 * 1024 * 1024,
        ),
    )(w2d, b2d, x3d)

    if HWp != HW:
        out3d = out3d[:, :, :HW]
    return out3d.reshape(N, Cout, H, W)


if __name__ == "__main__":
    # Small shapes consistent with the module's forward.
    N, Cin, Cout, S = 2, 4, 8, 16

    key = jax.random.PRNGKey(0)
    kx, kw, kg, kb, km, kv = jax.random.split(key, 6)

    x = jax.random.normal(kx, (N, Cin, S, S), dtype=jnp.float32)
    weight = jax.random.normal(kw, (Cout, Cin, 1, 1), dtype=jnp.float32) * 0.1
    gamma = 1.0 + 0.1 * jax.random.normal(kg, (Cout,), dtype=jnp.float32)
    beta = 0.1 * jax.random.normal(kb, (Cout,), dtype=jnp.float32)
    running_mean = 0.1 * jax.random.normal(km, (Cout,), dtype=jnp.float32)
    running_var = 1.0 + 0.1 * jax.random.uniform(kv, (Cout,), dtype=jnp.float32)

    def reference(xx):
        y = jnp.einsum('nchw,oc->nohw', xx, weight.reshape(Cout, Cin))
        y = (y - running_mean[None, :, None, None]) / jnp.sqrt(
            running_var[None, :, None, None] + 1e-5)
        return y * gamma[None, :, None, None] + beta[None, :, None, None]

    # 1) Default bf16-operand path (f32 accumulation / f32 output).
    out = adjust_layer(x, weight, gamma, beta, running_mean, running_var)
    out = jax.block_until_ready(out)
    ref = reference(x)
    assert out.shape == (N, Cout, S, S)
    assert jnp.allclose(out, ref, atol=3e-2, rtol=3e-2)

    # 2) Exact f32 path.
    out_f32 = adjust_layer(x, weight, gamma, beta, running_mean, running_var,
                           compute_dtype=jnp.float32)
    out_f32 = jax.block_until_ready(out_f32)
    assert jnp.allclose(out_f32, ref, atol=1e-4, rtol=1e-4)

    # 3) Ragged pixel axis (7x7 = 49, not a multiple of 128) + image batching.
    x2 = jax.random.normal(kx, (4, Cin, 7, 7), dtype=jnp.float32)
    out2 = adjust_layer(x2, weight, gamma, beta, running_mean, running_var,
                        compute_dtype=jnp.float32)
    out2 = jax.block_until_ready(out2)
    assert out2.shape == (4, Cout, 7, 7)
    assert jnp.allclose(out2, reference(x2), atol=1e-4, rtol=1e-4)

    print("KERNEL_OK")
</pallas_src>

<mosaic_0001>
module attributes {stable_mosaic.version = 11 : i64} {
  func.func @_adjust_kernel(%arg0: i32, %arg1: i32, %arg2: memref<8x4xbf16, #tpu.memory_space<vmem>>, %arg3: memref<8x1xf32, #tpu.memory_space<vmem>>, %arg4: memref<1x4x256xbf16, #tpu.memory_space<vmem>>, %arg5: memref<1x8x256xf32, #tpu.memory_space<vmem>>) attributes {dimension_semantics = [#tpu.dimension_semantics<parallel>, #tpu.dimension_semantics<parallel>], iteration_bounds = array<i64: 2, 1>, scalar_prefetch = 0 : i64, scratch_operands = 0 : i64, tpu.core_type = #tpu.core_type<tc>, window_params = [{pipeline_mode = #tpu.pipeline_mode<synchronous>, transform_indices = @transform_0, window_bounds = array<i64: 8, 4>}, {pipeline_mode = #tpu.pipeline_mode<synchronous>, transform_indices = @transform_1, window_bounds = array<i64: 8, 1>}, {transform_indices = @transform_2, window_bounds = array<i64: 1, 4, 256>}, {transform_indices = @transform_3, window_bounds = array<i64: 1, 8, 256>}]} {
    %c0 = arith.constant 0 : index
    %c0_0 = arith.constant 0 : index
    %0 = vector.load %arg2[%c0, %c0_0] : memref<8x4xbf16, #tpu.memory_space<vmem>>, vector<8x4xbf16>
    %c0_1 = arith.constant 0 : index
    %c0_2 = arith.constant 0 : index
    %1 = vector.load %arg3[%c0_1, %c0_2] : memref<8x1xf32, #tpu.memory_space<vmem>>, vector<8x1xf32>
    %c0_3 = arith.constant 0 : index
    %c0_4 = arith.constant 0 : index
    %c0_5 = arith.constant 0 : index
    %2 = vector.load %arg4[%c0_3, %c0_4, %c0_5] : memref<1x4x256xbf16, #tpu.memory_space<vmem>>, vector<1x4x256xbf16>
    %3 = vector.shape_cast %2 : vector<1x4x256xbf16> to vector<4x256xbf16>
    %cst = arith.constant dense<0.000000e+00> : vector<8x256xf32>
    %4 = tpu.matmul %0, %3, %cst {dimension_numbers = #tpu.dot_dimension_numbers<[1], [0], [0], [1], [0, 0, 1, 1], [], []>} : vector<8x4xbf16>, vector<4x256xbf16>, vector<8x256xf32> -> vector<8x256xf32>
    %5 = vector.broadcast %1 : vector<8x1xf32> to vector<8x256xf32>
    %6 = arith.addf %4, %5 : vector<8x256xf32>
    %c0_6 = arith.constant 0 : index
    %c0_7 = arith.constant 0 : index
    %c0_8 = arith.constant 0 : index
    %7 = vector.load %arg5[%c0_6, %c0_7, %c0_8] : memref<1x8x256xf32, #tpu.memory_space<vmem>>, vector<1x8x256xf32>
    %8 = vector.shape_cast %7 : vector<1x8x256xf32> to vector<8x256xf32>
    %9 = vector.shape_cast %6 : vector<8x256xf32> to vector<1x8x256xf32>
    tpu.vector_store %arg5[%c0_6, %c0_7, %c0_8], %9 {strides = array<i32>} : memref<1x8x256xf32, #tpu.memory_space<vmem>>, vector<1x8x256xf32>,
    return
  }
  func.func @transform_0(%arg0: i32, %arg1: i32) -> (i32, i32) {
    %c0_i32 = arith.constant 0 : i32
    %c0_i32_0 = arith.constant 0 : i32
    %c0_i32_1 = arith.constant 0 : i32
    return %c0_i32, %c0_i32_0 : i32, i32
  }
  func.func @transform_1(%arg0: i32, %arg1: i32) -> (i32, i32) {
    %c0_i32 = arith.constant 0 : i32
    %c0_i32_0 = arith.constant 0 : i32
    %c0_i32_1 = arith.constant 0 : i32
    return %c0_i32, %c0_i32_0 : i32, i32
  }
  func.func @transform_2(%arg0: i32, %arg1: i32) -> (i32, i32, i32) {
    %c0_i32 = arith.constant 0 : i32
    %c0_i32_0 = arith.constant 0 : i32
    return %arg0, %c0_i32, %arg1 : i32, i32, i32
  }
  func.func @transform_3(%arg0: i32, %arg1: i32) -> (i32, i32, i32) {
    %c0_i32 = arith.constant 0 : i32
    %c0_i32_0 = arith.constant 0 : i32
    return %arg0, %c0_i32, %arg1 : i32, i32, i32
  }
}

</mosaic_0001>

<llo_original>
// kernel: adjust_layer.1
$region0: #{adjust_layer.1}
  #allocation0 [shape = 'u32[]', space=smem, size = 0x4, offset = 0x4, fixed_abs, tag = 'smem constant byte address 0x4 - core index']
  #allocation1 [shape = 'u32[144,128]{1,0:T(1,128)}', space=vmem, size = 0x12000, scoped, tag = 'internal scratch']
  %s0 = inlined_call_operand.vmem [shape: bf16[8,4], index: 0, kind: input, shape index: {}]
  %s1 = inlined_call_operand.vmem [shape: f32[8,1], index: 1, kind: input, shape index: {}]
  %s2 = inlined_call_operand.vmem [shape: bf16[2,4,256], index: 2, kind: input, shape index: {}]
  %s3 = inlined_call_operand.vmem [shape: f32[2,8,256], index: 3, kind: output, shape index: {}]
  %s4 = sld [smem:[#allocation0]]
  $region45: #{adjust_layer.1} parent=0
    _
  %s6 = ssub.s32 1, %s4
  %s7 = scalar_select 0, %s6, %s4
  loop: start=0, step=1, limit=4
  $region2: #{adjust_layer.1} parent=0 // loop_pre_header
    _
  $region3: #{adjust_layer.1} parent=0 // loop_header
    %s9 = sphi 0, %s13
    %p10 = scmp.ge.s32.totalorder %s9, 4
    %s16 = sphi 0, %s28
    %s17 = sphi 0, %s24
    %s18 = sphi 0, %s16
    %s19 = sphi 0, %s17
    %s20 = sphi 0, %s18
    %s21 = sphi 0, %s19
    %s29 = sphi 0, %s29
    %s31 = sphi 0, %s29
    %s32 = sphi 0, %s31
    %s46 = sphi 0, %s32
    %s50 = sphi 0, %s50
    %s52 = sphi 0, %s50
    %s53 = sphi 0, %s52
    %s67 = sphi 0, %s53
    %s75 = sphi 0, %s77
    %s78 = sphi 0, %s75
    %s79 = sphi 0, %s78
    %s95 = sphi 0, %s79
    %s103 = sphi 0, %s105
    %s106 = sphi 0, %s103
    %s107 = sphi 0, %s106
    %s123 = sphi 0, %s107
  $region4: #{adjust_layer.1} parent=0 // loop_header_branch
    %12 = sbr.rel (%p10) target = $region8
  $region5: #{adjust_layer.1} parent=0 // loop_body
    %s14 = ssub.s32 %s9, 1
    %s15 = ssub.s32 %s9, 2
    %s22 = sadd.s32 1, %s17
    %p23 = scmp.ge.s32.totalorder %s22, 1
    %s24 = scalar_select %p23, 0, %s22
    %s25 = sadd.s32 1, %s16
    %s26 = scalar_select %p23, %s25, %s16
    %p27 = scmp.ge.s32.totalorder %s26, 2
    %s28 = scalar_select %p27, 0, %s26
    %s30 = sadd.s32 %s29, 1
    %p33 = scmp.eq.s32.totalorder %s9, 1
    %p34 = scmp.ne.s32.totalorder %s29, %s31
    %p35 = scmp.eq.s32.totalorder %s9, 0
    %p36 = por %p34, %p35
    %p37 = scmp.ne.s32.totalorder %s29, %s31
    %p38 = scmp.eq.s32.totalorder %s14, 1
    %p39 = por %p37, %p38
    %p40 = scmp.ne.s32.totalorder %s31, %s32
    %p41 = scmp.eq.s32.totalorder %s14, 0
    %p42 = por %p40, %p41
    %p43 = scmp.ne.s32.totalorder %s31, %s32
    %p44 = scmp.eq.s32.totalorder %s15, 1
    %p45 = por %p43, %p44
    %p47 = scmp.ne.s32.totalorder %s32, %s46
    %p48 = scmp.eq.s32.totalorder %s15, 0
    %p49 = por %p47, %p48
    %s51 = sadd.s32 %s50, 1
    %p54 = scmp.eq.s32.totalorder %s9, 1
    %p55 = scmp.ne.s32.totalorder %s50, %s52
    %p56 = scmp.eq.s32.totalorder %s9, 0
    %p57 = por %p55, %p56
    %p58 = scmp.ne.s32.totalorder %s50, %s52
    %p59 = scmp.eq.s32.totalorder %s14, 1
    %p60 = por %p58, %p59
    %p61 = scmp.ne.s32.totalorder %s52, %s53
    %p62 = scmp.eq.s32.totalorder %s14, 0
    %p63 = por %p61, %p62
    %p64 = scmp.ne.s32.totalorder %s52, %s53
    %p65 = scmp.eq.s32.totalorder %s15, 1
    %p66 = por %p64, %p65
    %p68 = scmp.ne.s32.totalorder %s53, %s67
    %p69 = scmp.eq.s32.totalorder %s15, 0
    %p70 = por %p68, %p69
    %s71 = ssub.s32 %s16, %s28
    %s72 = ssub.s32 %s17, %s24
    %s73 = sor.u32 %s71, %s72
    %p74 = scmp.eq.s32.totalorder %s73, 0
    %s76 = sadd.s32 %s75, 1
    %s77 = scalar_select %p74, %s75, %s76
    %p80 = pneg %p74
    %p81 = scmp.eq.s32.totalorder %s9, 1
    %p82 = por %p80, %p81
    %p83 = scmp.ne.s32.totalorder %s75, %s78
    %p84 = scmp.eq.s32.totalorder %s9, 0
    %p85 = por %p83, %p84
    %p86 = scmp.ne.s32.totalorder %s75, %s78
    %p87 = scmp.eq.s32.totalorder %s14, 1
    %p88 = por %p86, %p87
    %p89 = scmp.ne.s32.totalorder %s78, %s79
    %p90 = scmp.eq.s32.totalorder %s14, 0
    %p91 = por %p89, %p90
    %p92 = scmp.ne.s32.totalorder %s78, %s79
    %p93 = scmp.eq.s32.totalorder %s15, 1
    %p94 = por %p92, %p93
    %p96 = scmp.ne.s32.totalorder %s79, %s95
    %p97 = scmp.eq.s32.totalorder %s15, 0
    %p98 = por %p96, %p97
    %s99 = ssub.s32 %s16, %s28
    %s100 = ssub.s32 %s17, %s24
    %s101 = sor.u32 %s99, %s100
    %p102 = scmp.eq.s32.totalorder %s101, 0
    %s104 = sadd.s32 %s103, 1
    %s105 = scalar_select %p102, %s103, %s104
    %p108 = pneg %p102
    %p109 = scmp.eq.s32.totalorder %s9, 1
    %p110 = por %p108, %p109
    %p111 = scmp.ne.s32.totalorder %s103, %s106
    %p112 = scmp.eq.s32.totalorder %s9, 0
    %p113 = por %p111, %p112
    %p114 = scmp.ne.s32.totalorder %s103, %s106
    %p115 = scmp.eq.s32.totalorder %s14, 1
    %p116 = por %p114, %p115
    %p117 = scmp.ne.s32.totalorder %s106, %s107
    %p118 = scmp.eq.s32.totalorder %s14, 0
    %p119 = por %p117, %p118
    %p120 = scmp.ne.s32.totalorder %s106, %s107
    %p121 = scmp.eq.s32.totalorder %s15, 1
    %p122 = por %p120, %p121
    %p124 = scmp.ne.s32.totalorder %s107, %s123
    %p125 = scmp.eq.s32.totalorder %s15, 0
    %p126 = por %p124, %p125
    %p127 = scmp.le.s32.totalorder 1, %s9
    %p128 = scmp.lt.s32.totalorder %s9, 3
    %p129 = pnand %p127, %p128
    %p130 = pneg %p129
    // Predicated region
    $region9: #{adjust_layer.1} parent=5 // pred_check
      _
    $region10: #{adjust_layer.1} parent=5 // pred_check_branch
      %132 = sbr.rel (%p129) target = $region12
    $region11: #{adjust_layer.1} parent=5 // pred_region
      %s133 = ssub.s32 %s9, 1
      // Predicated region
      $region13: #{adjust_layer.1} parent=11 // pred_check
        %p134 = pneg %p42
      $region14: #{adjust_layer.1} parent=11 // pred_check_branch
        %136 = sbr.rel (%p134) target = $region16
      $region15: #{adjust_layer.1} parent=11 // pred_region
        _
      $region16: #{adjust_layer.1} parent=11 // pred_fallthru
        _
      // Predicated region
      $region17: #{adjust_layer.1} parent=11 // pred_check
        %p137 = pneg %p63
      $region18: #{adjust_layer.1} parent=11 // pred_check_branch
        %139 = sbr.rel (%p137) target = $region20
      $region19: #{adjust_layer.1} parent=11 // pred_region
        _
      $region20: #{adjust_layer.1} parent=11 // pred_fallthru
        _
    $region12: #{adjust_layer.1} parent=5 // pred_fallthru
      _
    %p140 = scmp.lt.s32.totalorder %s9, 2
    // Predicated region
    $region21: #{adjust_layer.1} parent=5 // pred_check
      %p141 = pneg %p140
    $region22: #{adjust_layer.1} parent=5 // pred_check_branch
      %143 = sbr.rel (%p141) target = $region24
    $region23: #{adjust_layer.1} parent=5 // pred_region
      // Predicated region
      $region25: #{adjust_layer.1} parent=23 // pred_check
        %p144 = pneg %p85
      $region26: #{adjust_layer.1} parent=23 // pred_check_branch
        %146 = sbr.rel (%p144) target = $region28
      $region27: #{adjust_layer.1} parent=23 // pred_region
        %s147 = smul.u32 2, %s17
        %p148 = scmp.lt.s32.totalorder %s16, 1
        %s149 = scalar_select %p148, %s16, 1
        %p150 = scmp.lt.s32.totalorder %s147, 1
        %s151 = scalar_select %p150, %s147, 1
        %s152 = smul.addr %s149, 2
        %s153 = sadd.s32 %s151, %s152
        %s154 = smul.addr %s153, 2
        %s155 = scalar_lea.vmem %s2, %s154
        %s156 = smul.u32 2, %s17
      $region28: #{adjust_layer.1} parent=23 // pred_fallthru
        _
    $region24: #{adjust_layer.1} parent=5 // pred_fallthru
      _
    %p157 = scmp.le.s32.totalorder 1, %s9
    %p158 = scmp.lt.s32.totalorder %s9, 3
    %p159 = pnand %p157, %p158
    %p160 = pneg %p159
    // Predicated region
    $region29: #{adjust_layer.1} parent=5 // pred_check
      _
    $region30: #{adjust_layer.1} parent=5 // pred_check_branch
      %162 = sbr.rel (%p159) target = $region32
    $region31: #{adjust_layer.1} parent=5 // pred_region
      %s163 = ssub.s32 %s9, 1
      %p164 = pneg %p42
      %p165 = pneg %p39
      %p166 = pneg %p63
      %p167 = pneg %p60
      %s168 = smul.u32 2, %s19
      %p169 = scmp.lt.s32.totalorder %s18, 1
      %s170 = scalar_select %p169, %s18, 1
      %p171 = scmp.lt.s32.totalorder %s168, 1
      %s172 = scalar_select %p171, %s168, 1
      %s173 = smul.addr %s170, 2
      %s174 = sadd.s32 %s172, %s173
      %s175 = smul.addr %s174, 2
      %s176 = scalar_lea.vmem %s2, %s175
      %p177 = pneg %p91
      %p178 = pneg %p88
      %p179 = pneg %p119
      %p180 = pneg %p116
      %s181 = smul.u32 2, %s19
      %p182 = scmp.lt.s32.totalorder %s18, 1
      %s183 = scalar_select %p182, %s18, 1
      %p184 = scmp.lt.s32.totalorder %s181, 1
      %s185 = scalar_select %p184, %s181, 1
      %s186 = smul.addr %s183, 2
      %s187 = sadd.s32 %s185, %s186
      %s188 = smul.addr %s187, 8
      %s189 = scalar_lea.vmem %s3, %s188
      %s190 = smul.u32 2, %s19
      %p191 = scmp.lt.s32.totalorder %s18, 1
      %s192 = scalar_select %p191, %s18, 1
      %p193 = scmp.lt.s32.totalorder %s190, 1
      %s194 = scalar_select %p193, %s190, 1
      %s195 = smul.addr %s192, 2
      %s196 = sadd.s32 %s194, %s195
      %s197 = smul.addr %s196, 2
      %s198 = scalar_lea.vmem %s2, %s197
      %s199 = smul.u32 2, %s19
      %s200 = smul.u32 2, %s19
      %p201 = scmp.lt.s32.totalorder %s18, 1
      %s202 = scalar_select %p201, %s18, 1
      %p203 = scmp.lt.s32.totalorder %s200, 1
      %s204 = scalar_select %p203, %s200, 1
      %s205 = smul.addr %s202, 2
      %s206 = sadd.s32 %s204, %s205
      %s207 = smul.addr %s206, 8
      %s208 = scalar_lea.vmem %s3, %s207
      %s209 = smul.u32 2, %s19
      %v211 = vld [vmem:[%s0] sm:$0xf]
      %v212 = vld [vmem:[%s1] sm:$0xff]
      %v213 = vld [vmem:[%s198] sm:$0xf]
      %215 = vset.pattern.permute.xlu0 0
      %216 = vperm.xlu0 %215, %v212
      %v217 = vpop.permute.xlu0 %216
      %v221 = vunpack.c.l.s4 1983009808
      %v222 = vunpack.c.0.s8 %v221
      %v223 = vlaneseq
      %v224 = vshrl.u32 %v223, 7
      %v225 = vsub.s32 %v222, %v224
      %v226 = vrot.slane %v213, %v225
      %v227 = vcombine.high %v226, %v226
      %vm228 = vcmask 31744
      %v230 = vsel %vm228, %v211, 0
      %vm232 = vcmask 1041408
      %v234 = vsel %vm232, %v226, 0
      %v237 = vsel %vm232, %v227, 0
      %239 = vmatprep.subr.bf16.mxu0 %v237
      %240 = vmatpush1.bf16.msra.mxu0 %v234
      %241 = vmatprep.subr.bf16.mxu0 0
      %242 = vmatpush1.bf16.msra.mxu0 0
      %243 = vmatprep.subr.bf16.mxu0 0
      %244 = vmatpush1.bf16.msra.mxu0 0
      %245 = vmatprep.subr.bf16.mxu0 0
      %246 = vmatpush1.bf16.msra.mxu0 0
      %247 = vmatprep.subr.bf16.mxu0 0
      %248 = vmatpush1.bf16.msra.mxu0 0
      %249 = vmatprep.subr.bf16.mxu0 0
      %250 = vmatpush1.bf16.msra.mxu0 0
      %251 = vmatprep.subr.bf16.mxu0 0
      %252 = vmatpush1.bf16.msra.mxu0 0
      %253 = vmatprep.subr.bf16.mxu0 0
      %254 = vmatpush1.bf16.msra.mxu0 0
      %255 = vmatprep.subr.bf16.mxu0 0
      %256 = vmatpush1.bf16.msra.mxu0 0
      %257 = vmatprep.subr.bf16.mxu0 0
      %258 = vmatpush1.bf16.msra.mxu0 0
      %259 = vmatprep.subr.bf16.mxu0 0
      %260 = vmatpush1.bf16.msra.mxu0 0
      %261 = vmatprep.subr.bf16.mxu0 0
      %262 = vmatpush1.bf16.msra.mxu0 0
      %263 = vmatprep.subr.bf16.mxu0 0
      %264 = vmatpush1.bf16.msra.mxu0 0
      %265 = vmatprep.subr.bf16.mxu0 0
      %266 = vmatpush1.bf16.msra.mxu0 0
      %267 = vmatprep.subr.bf16.mxu0 0
      %268 = vmatpush1.bf16.msra.mxu0 0
      %269 = vmatprep.subr.bf16.mxu0 0
      %270 = vmatpush1.bf16.msra.mxu0 0
      %271 = vmatprep.mubr.bf16.mxu0 0
      %272 = vmatmul.mubr.bf16.gmra.mrb[0].mxu0 %v230
      %v273 = vpop.f32.mrb[0].mxu0
      %v274 = vadd.f32 %v217, %v273
      %v275 = vpop.f32.mrb[0].mxu0
      %v276 = vadd.f32 %v217, %v275
      %v277 = vpop.f32.mrb[0].mxu0
      %v278 = vpop.f32.mrb[0].mxu0
      %279 = vdwg.mxu0
      %280 = vst [vmem:[%s208] sm:$0xff] %v274
      %281 = vst [vmem:[%s208 + $0x8] sm:$0xff] %v276
      %s282 = smul.u32 2, %s19
      %p283 = scmp.lt.s32.totalorder %s18, 1
      %s284 = scalar_select %p283, %s18, 1
      %p285 = scmp.lt.s32.totalorder %s282, 1
      %s286 = scalar_select %p285, %s282, 1
      %s287 = smul.addr %s284, 2
      %s288 = sadd.s32 %s286, %s287
      %s289 = smul.addr %s288, 8
      %s290 = scalar_lea.vmem %s3, %s289
      // Predicated region
      $region33: #{adjust_layer.1} parent=31 // pred_check
        %p291 = pneg %p116
      $region34: #{adjust_layer.1} parent=31 // pred_check_branch
        %293 = sbr.rel (%p291) target = $region36
      $region35: #{adjust_layer.1} parent=31 // pred_region
        %s294 = smul.u32 2, %s19
      $region36: #{adjust_layer.1} parent=31 // pred_fallthru
        _
    $region32: #{adjust_layer.1} parent=5 // pred_fallthru
      _
    %p295 = scmp.le.s32.totalorder 2, %s9
    // Predicated region
    $region37: #{adjust_layer.1} parent=5 // pred_check
      %p296 = pneg %p295
    $region38: #{adjust_layer.1} parent=5 // pred_check_branch
      %298 = sbr.rel (%p296) target = $region40
    $region39: #{adjust_layer.1} parent=5 // pred_region
      %s299 = ssub.s32 %s9, 2
      // Predicated region
      $region41: #{adjust_layer.1} parent=39 // pred_check
        %p300 = pneg %p122
      $region42: #{adjust_layer.1} parent=39 // pred_check_branch
        %302 = sbr.rel (%p300) target = $region44
      $region43: #{adjust_layer.1} parent=39 // pred_region
        %s303 = smul.u32 2, %s21
        %p304 = scmp.lt.s32.totalorder %s20, 1
        %s305 = scalar_select %p304, %s20, 1
        %p306 = scmp.lt.s32.totalorder %s303, 1
        %s307 = scalar_select %p306, %s303, 1
        %s308 = smul.addr %s305, 2
        %s309 = sadd.s32 %s307, %s308
        %s310 = smul.addr %s309, 8
        %s311 = scalar_lea.vmem %s3, %s310
      $region44: #{adjust_layer.1} parent=39 // pred_fallthru
        _
    $region40: #{adjust_layer.1} parent=5 // pred_fallthru
      _
  $region6: #{adjust_layer.1} parent=0 // loop_footer
    %s13 = sadd.s32 1, %s9
  $region7: #{adjust_layer.1} parent=0 // loop_footer_branch
    %8 = sbr.rel target = $region3
  $region8: #{adjust_layer.1} parent=0 // loop_exit
    _

</llo_original>
